<compile_context>
chip_gen: v5e
topology: v5e:2x2
jax: 0.10.0
libtpu: 0.0.40
codegen_flags: <defaults>
</compile_context>

<pallas_src>
import functools

import jax
import jax.numpy as jnp
from jax.experimental import pallas as pl
from jax.experimental.pallas import tpu as pltpu


def _critic_kernel(x_ref, w1_ref, b1_ref, w2_ref, b2_ref,
                   w3_ref, b3_ref, w4_ref, b4_ref, o_ref, *, neg_h):
    # x_ref: (F, T) feature-major batch tile; activations are (64, T), all f32.
    h = jnp.dot(w1_ref[...], x_ref[...], preferred_element_type=jnp.float32)
    h = jnp.maximum(h + b1_ref[...], 0.0)                        # (64, T)

    h = jnp.dot(w2_ref[...], h, preferred_element_type=jnp.float32)
    h = jnp.maximum(h + b2_ref[...], 0.0)                        # (64, T)

    h = jnp.dot(w3_ref[...], h, preferred_element_type=jnp.float32)
    h = jnp.maximum(h + b3_ref[...], 0.0)                        # (64, T)

    # Layer 4 (64 -> 1): VPU multiply + sublane (XLU) reduce, not an N=1 MXU
    # matmul.  -H is pre-negated so the epilogue is a single multiply.
    logit = jnp.sum(h * w4_ref[...], axis=0, keepdims=True) + b4_ref[...]
    q = jax.nn.sigmoid(logit)                                    # (1, T)
    o_ref[...] = (q * neg_h).astype(o_ref.dtype)


def critic_forward(state, action, goal, params, H, *, tile_b=4096):
    """Pallas-backed Critic.forward(state, action, goal) == -sigmoid(MLP(cat)) * H."""
    B, S = state.shape
    A = action.shape[1]
    assert goal.shape == (B, S), (goal.shape, (B, S))
    F = 2 * S + A

    # Feature-major (F, B) input: contiguous lane-dense DMA tiles, and layer 1
    # becomes a single NN matmul inside the kernel (concat done here, ~80 B/row).
    x_t = jnp.concatenate(
        [state.astype(jnp.float32),
         action.astype(jnp.float32),
         goal.astype(jnp.float32)], axis=1).T                    # (F, B)

    # Params in PyTorch layout: W = (out, in), b = (out,).  Everything f32.
    W1, b1, W2, b2, W3, b3, W4, b4 = params
    w1 = W1.astype(jnp.float32)                                  # (64, F)
    w2 = W2.astype(jnp.float32)                                  # (64, 64)
    w3 = W3.astype(jnp.float32)                                  # (64, 64)
    w4 = W4.reshape(-1, 1).astype(jnp.float32)                   # (64, 1)
    b1c = b1.reshape(-1, 1).astype(jnp.float32)                  # (64, 1)
    b2c = b2.reshape(-1, 1).astype(jnp.float32)
    b3c = b3.reshape(-1, 1).astype(jnp.float32)
    b4s = b4.reshape(1, 1).astype(jnp.float32)                   # (1, 1)
    weights = (w1, b1c, w2, b2c, w3, b3c, w4, b4s)

    if B <= tile_b:
        # Single full-extent block: no padding, no partial blocks at all.
        tile_b = B
        num_tiles = 1
    else:
        # Lane-dense tiles: multiple of 128 so output stores are unmasked.
        tile_b = max(128, (tile_b // 128) * 128)
        num_tiles = pl.cdiv(B, tile_b)
        # Trailing input block may be partial; stale columns stay isolated
        # (batch columns are independent) and are discarded by the final slice.
    b_out = num_tiles * tile_b

    def const_spec(arr):
        # Same block every grid step -> stays resident in VMEM.
        return pl.BlockSpec(arr.shape, lambda i: (0, 0))

    grid_spec = pltpu.PrefetchScalarGridSpec(
        num_scalar_prefetch=0,
        grid=(num_tiles,),
        in_specs=[pl.BlockSpec((F, tile_b), lambda i: (0, i))]
                 + [const_spec(w) for w in weights],
        out_specs=pl.BlockSpec((1, tile_b), lambda i: (0, i)),
    )

    out = pl.pallas_call(
        # H is a fixed module hyper-parameter; baking it in as a constant means
        # changing H recompiles (acceptable for this module).
        functools.partial(_critic_kernel, neg_h=-float(H)),
        out_shape=jax.ShapeDtypeStruct((1, b_out), jnp.float32),
        grid_spec=grid_spec,
        compiler_params=pltpu.CompilerParams(
            dimension_semantics=("parallel",)),  # v7x: batch tiles over 2 TCs
    )(x_t, *weights)

    # Drop padded columns and restore the (B, 1) module output shape.
    return out[0, :B].reshape(B, 1)


def init_params(key, state_dim, action_dim, hidden=64):
    """PyTorch-style Linear init; weights in (out, in) layout, biases (out,)."""
    in_dim = 2 * state_dim + action_dim
    dims = [(in_dim, hidden), (hidden, hidden), (hidden, hidden), (hidden, 1)]
    params = []
    for din, dout in dims:
        key, kw, kb = jax.random.split(key, 3)
        bound = 1.0 / float(din) ** 0.5
        params.append(jax.random.uniform(kw, (dout, din), jnp.float32, -bound, bound))
        params.append(jax.random.uniform(kb, (dout,), jnp.float32, -bound, bound))
    return tuple(params)


def critic_reference(state, action, goal, params, H):
    """Pure-JAX f32 reference for correctness checking."""
    W1, b1, W2, b2, W3, b3, W4, b4 = params
    x = jnp.concatenate([state, action, goal], axis=1).astype(jnp.float32)
    hp = jax.lax.Precision.HIGHEST
    h = jnp.maximum(jnp.dot(x, W1.T, precision=hp) + b1, 0.0)
    h = jnp.maximum(jnp.dot(h, W2.T, precision=hp) + b2, 0.0)
    h = jnp.maximum(jnp.dot(h, W3.T, precision=hp) + b3, 0.0)
    q = jax.nn.sigmoid(jnp.dot(h, W4.T, precision=hp) + b4)
    return -q * H


if __name__ == "__main__":
    state_dim, action_dim, H = 8, 4, 20.0
    key = jax.random.PRNGKey(0)
    k_s, k_a, k_g, k_p, k_s2, k_a2, k_g2 = jax.random.split(key, 7)
    params = init_params(k_p, state_dim, action_dim)

    # --- small batch (single full-extent block, no padding anywhere) ---------
    B = 8
    state = jax.random.normal(k_s, (B, state_dim), jnp.float32)
    action = jax.random.normal(k_a, (B, action_dim), jnp.float32)
    goal = jax.random.normal(k_g, (B, state_dim), jnp.float32)
    ref = critic_reference(state, action, goal, params, H)

    out = jax.block_until_ready(critic_forward(state, action, goal, params, H))
    assert out.shape == (B, 1), out.shape
    assert jnp.allclose(out, ref, atol=1e-2, rtol=1e-2), (out, ref)

    # --- larger batch: exercises the batch grid + partial trailing block -----
    B2 = 300
    state2 = jax.random.normal(k_s2, (B2, state_dim), jnp.float32)
    action2 = jax.random.normal(k_a2, (B2, action_dim), jnp.float32)
    goal2 = jax.random.normal(k_g2, (B2, state_dim), jnp.float32)
    ref2 = critic_reference(state2, action2, goal2, params, H)

    out2 = jax.block_until_ready(
        critic_forward(state2, action2, goal2, params, H, tile_b=128))
    assert out2.shape == (B2, 1), out2.shape
    assert jnp.allclose(out2, ref2, atol=1e-2, rtol=1e-2), (out2, ref2)

    print("KERNEL_OK")
</pallas_src>

<mosaic_0001>
module attributes {stable_mosaic.version = 11 : i64} {
  func.func @_critic_kernel(%arg0: i32, %arg1: memref<20x8xf32, #tpu.memory_space<vmem>>, %arg2: memref<64x20xf32, #tpu.memory_space<vmem>>, %arg3: memref<64x1xf32, #tpu.memory_space<vmem>>, %arg4: memref<64x64xf32, #tpu.memory_space<vmem>>, %arg5: memref<64x1xf32, #tpu.memory_space<vmem>>, %arg6: memref<64x64xf32, #tpu.memory_space<vmem>>, %arg7: memref<64x1xf32, #tpu.memory_space<vmem>>, %arg8: memref<64x1xf32, #tpu.memory_space<vmem>>, %arg9: memref<1x1xf32, #tpu.memory_space<vmem>>, %arg10: memref<1x8xf32, #tpu.memory_space<vmem>>) attributes {dimension_semantics = [#tpu.dimension_semantics<parallel>], iteration_bounds = array<i64: 1>, scalar_prefetch = 0 : i64, scratch_operands = 0 : i64, tpu.core_type = #tpu.core_type<tc>, window_params = [{transform_indices = @transform_0, window_bounds = array<i64: 20, 8>}, {pipeline_mode = #tpu.pipeline_mode<synchronous>, transform_indices = @transform_1, window_bounds = array<i64: 64, 20>}, {pipeline_mode = #tpu.pipeline_mode<synchronous>, transform_indices = @transform_2, window_bounds = array<i64: 64, 1>}, {pipeline_mode = #tpu.pipeline_mode<synchronous>, transform_indices = @transform_3, window_bounds = array<i64: 64, 64>}, {pipeline_mode = #tpu.pipeline_mode<synchronous>, transform_indices = @transform_4, window_bounds = array<i64: 64, 1>}, {pipeline_mode = #tpu.pipeline_mode<synchronous>, transform_indices = @transform_5, window_bounds = array<i64: 64, 64>}, {pipeline_mode = #tpu.pipeline_mode<synchronous>, transform_indices = @transform_6, window_bounds = array<i64: 64, 1>}, {pipeline_mode = #tpu.pipeline_mode<synchronous>, transform_indices = @transform_7, window_bounds = array<i64: 64, 1>}, {pipeline_mode = #tpu.pipeline_mode<synchronous>, transform_indices = @transform_8, window_bounds = array<i64: 1, 1>}, {transform_indices = @transform_9, window_bounds = array<i64: 1, 8>}]} {
    %c0 = arith.constant 0 : index
    %c0_0 = arith.constant 0 : index
    %0 = vector.load %arg2[%c0, %c0_0] : memref<64x20xf32, #tpu.memory_space<vmem>>, vector<64x20xf32>
    %c0_1 = arith.constant 0 : index
    %c0_2 = arith.constant 0 : index
    %1 = vector.load %arg1[%c0_1, %c0_2] : memref<20x8xf32, #tpu.memory_space<vmem>>, vector<20x8xf32>
    %cst = arith.constant dense<0.000000e+00> : vector<64x8xf32>
    %2 = tpu.matmul %0, %1, %cst {dimension_numbers = #tpu.dot_dimension_numbers<[1], [0], [0], [1], [0, 0, 1, 1], [], []>} : vector<64x20xf32>, vector<20x8xf32>, vector<64x8xf32> -> vector<64x8xf32>
    %c0_3 = arith.constant 0 : index
    %c0_4 = arith.constant 0 : index
    %3 = vector.load %arg3[%c0_3, %c0_4] : memref<64x1xf32, #tpu.memory_space<vmem>>, vector<64x1xf32>
    %4 = vector.broadcast %3 : vector<64x1xf32> to vector<64x8xf32>
    %5 = arith.addf %2, %4 : vector<64x8xf32>
    %cst_5 = arith.constant 0.000000e+00 : f32
    %6 = vector.broadcast %cst_5 : f32 to vector<64x8xf32>
    %7 = arith.maximumf %5, %6 : vector<64x8xf32>
    %c0_6 = arith.constant 0 : index
    %c0_7 = arith.constant 0 : index
    %8 = vector.load %arg4[%c0_6, %c0_7] : memref<64x64xf32, #tpu.memory_space<vmem>>, vector<64x64xf32>
    %cst_8 = arith.constant dense<0.000000e+00> : vector<64x8xf32>
    %9 = tpu.matmul %8, %7, %cst_8 {dimension_numbers = #tpu.dot_dimension_numbers<[1], [0], [0], [1], [0, 0, 1, 1], [], []>} : vector<64x64xf32>, vector<64x8xf32>, vector<64x8xf32> -> vector<64x8xf32>
    %c0_9 = arith.constant 0 : index
    %c0_10 = arith.constant 0 : index
    %10 = vector.load %arg5[%c0_9, %c0_10] : memref<64x1xf32, #tpu.memory_space<vmem>>, vector<64x1xf32>
    %11 = vector.broadcast %10 : vector<64x1xf32> to vector<64x8xf32>
    %12 = arith.addf %9, %11 : vector<64x8xf32>
    %cst_11 = arith.constant 0.000000e+00 : f32
    %13 = vector.broadcast %cst_11 : f32 to vector<64x8xf32>
    %14 = arith.maximumf %12, %13 : vector<64x8xf32>
    %c0_12 = arith.constant 0 : index
    %c0_13 = arith.constant 0 : index
    %15 = vector.load %arg6[%c0_12, %c0_13] : memref<64x64xf32, #tpu.memory_space<vmem>>, vector<64x64xf32>
    %cst_14 = arith.constant dense<0.000000e+00> : vector<64x8xf32>
    %16 = tpu.matmul %15, %14, %cst_14 {dimension_numbers = #tpu.dot_dimension_numbers<[1], [0], [0], [1], [0, 0, 1, 1], [], []>} : vector<64x64xf32>, vector<64x8xf32>, vector<64x8xf32> -> vector<64x8xf32>
    %c0_15 = arith.constant 0 : index
    %c0_16 = arith.constant 0 : index
    %17 = vector.load %arg7[%c0_15, %c0_16] : memref<64x1xf32, #tpu.memory_space<vmem>>, vector<64x1xf32>
    %18 = vector.broadcast %17 : vector<64x1xf32> to vector<64x8xf32>
    %19 = arith.addf %16, %18 : vector<64x8xf32>
    %cst_17 = arith.constant 0.000000e+00 : f32
    %20 = vector.broadcast %cst_17 : f32 to vector<64x8xf32>
    %21 = arith.maximumf %19, %20 : vector<64x8xf32>
    %c0_18 = arith.constant 0 : index
    %c0_19 = arith.constant 0 : index
    %22 = vector.load %arg8[%c0_18, %c0_19] : memref<64x1xf32, #tpu.memory_space<vmem>>, vector<64x1xf32>
    %23 = vector.broadcast %22 : vector<64x1xf32> to vector<64x8xf32>
    %24 = arith.mulf %21, %23 : vector<64x8xf32>
    %cst_20 = arith.constant dense<0.000000e+00> : vector<8xf32>
    %25 = vector.multi_reduction <add>, %24, %cst_20 [0] : vector<64x8xf32> to vector<8xf32>
    %26 = vector.shape_cast %25 : vector<8xf32> to vector<1x8xf32>
    %c0_21 = arith.constant 0 : index
    %c0_22 = arith.constant 0 : index
    %27 = vector.load %arg9[%c0_21, %c0_22] : memref<1x1xf32, #tpu.memory_space<vmem>>, vector<1x1xf32>
    %28 = vector.broadcast %27 : vector<1x1xf32> to vector<1x8xf32>
    %29 = arith.addf %26, %28 : vector<1x8xf32>
    %30 = arith.negf %29 : vector<1x8xf32>
    %31 = math.exp %30 : vector<1x8xf32>
    %cst_23 = arith.constant 1.000000e+00 : f32
    %32 = vector.broadcast %cst_23 : f32 to vector<1x8xf32>
    %33 = arith.addf %32, %31 : vector<1x8xf32>
    %34 = arith.divf %32, %33 : vector<1x8xf32>
    %cst_24 = arith.constant -2.000000e+01 : f32
    %35 = vector.broadcast %cst_24 : f32 to vector<1x8xf32>
    %36 = arith.mulf %34, %35 : vector<1x8xf32>
    %c0_25 = arith.constant 0 : index
    %c0_26 = arith.constant 0 : index
    %37 = vector.load %arg10[%c0_25, %c0_26] : memref<1x8xf32, #tpu.memory_space<vmem>>, vector<1x8xf32>
    tpu.vector_store %arg10[%c0_25, %c0_26], %36 {strides = array<i32>} : memref<1x8xf32, #tpu.memory_space<vmem>>, vector<1x8xf32>,
    return
  }
  func.func @transform_0(%arg0: i32) -> (i32, i32) {
    %c0_i32 = arith.constant 0 : i32
    %c0_i32_0 = arith.constant 0 : i32
    return %c0_i32, %arg0 : i32, i32
  }
  func.func @transform_1(%arg0: i32) -> (i32, i32) {
    %c0_i32 = arith.constant 0 : i32
    %c0_i32_0 = arith.constant 0 : i32
    %c0_i32_1 = arith.constant 0 : i32
    return %c0_i32, %c0_i32_0 : i32, i32
  }
  func.func @transform_2(%arg0: i32) -> (i32, i32) {
    %c0_i32 = arith.constant 0 : i32
    %c0_i32_0 = arith.constant 0 : i32
    %c0_i32_1 = arith.constant 0 : i32
    return %c0_i32, %c0_i32_0 : i32, i32
  }
  func.func @transform_3(%arg0: i32) -> (i32, i32) {
    %c0_i32 = arith.constant 0 : i32
    %c0_i32_0 = arith.constant 0 : i32
    %c0_i32_1 = arith.constant 0 : i32
    return %c0_i32, %c0_i32_0 : i32, i32
  }
  func.func @transform_4(%arg0: i32) -> (i32, i32) {
    %c0_i32 = arith.constant 0 : i32
    %c0_i32_0 = arith.constant 0 : i32
    %c0_i32_1 = arith.constant 0 : i32
    return %c0_i32, %c0_i32_0 : i32, i32
  }
  func.func @transform_5(%arg0: i32) -> (i32, i32) {
    %c0_i32 = arith.constant 0 : i32
    %c0_i32_0 = arith.constant 0 : i32
    %c0_i32_1 = arith.constant 0 : i32
    return %c0_i32, %c0_i32_0 : i32, i32
  }
  func.func @transform_6(%arg0: i32) -> (i32, i32) {
    %c0_i32 = arith.constant 0 : i32
    %c0_i32_0 = arith.constant 0 : i32
    %c0_i32_1 = arith.constant 0 : i32
    return %c0_i32, %c0_i32_0 : i32, i32
  }
  func.func @transform_7(%arg0: i32) -> (i32, i32) {
    %c0_i32 = arith.constant 0 : i32
    %c0_i32_0 = arith.constant 0 : i32
    %c0_i32_1 = arith.constant 0 : i32
    return %c0_i32, %c0_i32_0 : i32, i32
  }
  func.func @transform_8(%arg0: i32) -> (i32, i32) {
    %c0_i32 = arith.constant 0 : i32
    %c0_i32_0 = arith.constant 0 : i32
    %c0_i32_1 = arith.constant 0 : i32
    return %c0_i32, %c0_i32_0 : i32, i32
  }
  func.func @transform_9(%arg0: i32) -> (i32, i32) {
    %c0_i32 = arith.constant 0 : i32
    %c0_i32_0 = arith.constant 0 : i32
    return %c0_i32, %arg0 : i32, i32
  }
}

</mosaic_0001>

<llo_original>
// kernel: tpu_custom_call.1
$region0: #{tpu_custom_call.1}
  #allocation0 [shape = 'u32[]', space=smem, size = 0x4, offset = 0x4, fixed_abs, tag = 'smem constant byte address 0x4 - core index']
  #allocation1 [shape = 'u32[72,128]{1,0:T(1,128)}', space=vmem, size = 0x9000, scoped, tag = 'internal scratch']
  #allocation2 [shape = 'f32[1,1]{1,0:T(1,128)S(1)}', space=vmem, size = 0x200, scoped, tag = 'scoped memory for tpu_custom_call.1']
  %s0 = inlined_call_operand.vmem [shape: f32[20,8], index: 0, kind: input, shape index: {}]
  %s1 = inlined_call_operand.vmem [shape: f32[64,20], index: 1, kind: input, shape index: {}]
  %s2 = inlined_call_operand.vmem [shape: f32[64,1], index: 2, kind: input, shape index: {}]
  %s3 = inlined_call_operand.vmem [shape: f32[64,64], index: 3, kind: input, shape index: {}]
  %s4 = inlined_call_operand.vmem [shape: f32[64,1], index: 4, kind: input, shape index: {}]
  %s5 = inlined_call_operand.vmem [shape: f32[64,64], index: 5, kind: input, shape index: {}]
  %s6 = inlined_call_operand.vmem [shape: f32[64,1], index: 6, kind: input, shape index: {}]
  %s7 = inlined_call_operand.vmem [shape: f32[64,1], index: 7, kind: input, shape index: {}]
  %s8 = inlined_call_operand.<no memory space> [shape: f32[1,1], index: 8, kind: input, shape index: {}]
  %s9 = inlined_call_operand.hbm [shape: f32[1,8], index: 9, kind: output, shape index: {}]
  %s10 = sld [smem:[#allocation0]]
  $region46: #{tpu_custom_call.1} parent=0
    _
  %s12 = ssub.s32 1, %s10
  %s13 = scalar_select 0, %s12, %s10
  %v14 = vstv %s8
  %15 = vst [vmem:[#allocation2] sm:$0x1] %v14
  $region1: #{tpu_custom_call.1} parent=0
    #allocation3 [shape = 'u8[512]{0}', space=vmem, size = 0x400, scoped, tag = 'output window, operand 0, single buffered']
    #allocation4 [shape = 's32[1]{0}', space=sflag, size = 0x4, scoped, tag = 'scoped memory for tpu_custom_call.1']
    %16 = vsyncpa [#allocation4], 0
    // Predicated region
    $region2: #{tpu_custom_call.1} parent=1 // pred_check
      _
    $region3: #{tpu_custom_call.1} parent=1 // pred_check_branch
      %18 = sbr.rel (0) target = $region5
    $region4: #{tpu_custom_call.1} parent=1 // pred_region
      _
    $region5: #{tpu_custom_call.1} parent=1 // pred_fallthru
      _
    // Predicated region
    $region6: #{tpu_custom_call.1} parent=1 // pred_check
      _
    $region7: #{tpu_custom_call.1} parent=1 // pred_check_branch
      %20 = sbr.rel (0) target = $region9
    $region8: #{tpu_custom_call.1} parent=1 // pred_region
      _
    $region9: #{tpu_custom_call.1} parent=1 // pred_fallthru
      _
    // Predicated region
    $region10: #{tpu_custom_call.1} parent=1 // pred_check
      _
    $region11: #{tpu_custom_call.1} parent=1 // pred_check_branch
      %22 = sbr.rel (0) target = $region13
    $region12: #{tpu_custom_call.1} parent=1 // pred_region
      _
    $region13: #{tpu_custom_call.1} parent=1 // pred_fallthru
      _
    // Predicated region
    $region14: #{tpu_custom_call.1} parent=1 // pred_check
      _
    $region15: #{tpu_custom_call.1} parent=1 // pred_check_branch
      %24 = sbr.rel (0) target = $region17
    $region16: #{tpu_custom_call.1} parent=1 // pred_region
      _
    $region17: #{tpu_custom_call.1} parent=1 // pred_fallthru
      _
    // Predicated region
    $region18: #{tpu_custom_call.1} parent=1 // pred_check
      _
    $region19: #{tpu_custom_call.1} parent=1 // pred_check_branch
      %26 = sbr.rel (0) target = $region21
    $region20: #{tpu_custom_call.1} parent=1 // pred_region
      _
    $region21: #{tpu_custom_call.1} parent=1 // pred_fallthru
      _
    // Predicated region
    $region22: #{tpu_custom_call.1} parent=1 // pred_check
      _
    $region23: #{tpu_custom_call.1} parent=1 // pred_check_branch
      %28 = sbr.rel (0) target = $region25
    $region24: #{tpu_custom_call.1} parent=1 // pred_region
      _
    $region25: #{tpu_custom_call.1} parent=1 // pred_fallthru
      _
    // Predicated region
    $region26: #{tpu_custom_call.1} parent=1 // pred_check
      _
    $region27: #{tpu_custom_call.1} parent=1 // pred_check_branch
      %30 = sbr.rel (0) target = $region29
    $region28: #{tpu_custom_call.1} parent=1 // pred_region
      _
    $region29: #{tpu_custom_call.1} parent=1 // pred_fallthru
      _
    // Predicated region
    $region30: #{tpu_custom_call.1} parent=1 // pred_check
      _
    $region31: #{tpu_custom_call.1} parent=1 // pred_check_branch
      %32 = sbr.rel (0) target = $region33
    $region32: #{tpu_custom_call.1} parent=1 // pred_region
      _
    $region33: #{tpu_custom_call.1} parent=1 // pred_fallthru
      _
    // Predicated region
    $region34: #{tpu_custom_call.1} parent=1 // pred_check
      _
    $region35: #{tpu_custom_call.1} parent=1 // pred_check_branch
      %34 = sbr.rel (0) target = $region37
    $region36: #{tpu_custom_call.1} parent=1 // pred_region
      _
    $region37: #{tpu_custom_call.1} parent=1 // pred_fallthru
      _
    %v35 = vld [vmem:[%s1] sm:$0xff]
    %v36 = vld [vmem:[%s1 + $0x8] sm:$0xff]
    %v37 = vld [vmem:[%s1 + $0x10] sm:$0xff]
    %v38 = vld [vmem:[%s1 + $0x18] sm:$0xff]
    %v39 = vld [vmem:[%s1 + $0x20] sm:$0xff]
    %v40 = vld [vmem:[%s1 + $0x28] sm:$0xff]
    %v41 = vld [vmem:[%s1 + $0x30] sm:$0xff]
    %v42 = vld [vmem:[%s1 + $0x38] sm:$0xff]
    %v43 = vld [vmem:[%s0] sm:$0xff]
    %v44 = vld [vmem:[%s0 + $0x8] sm:$0xff]
    %v45 = vld [vmem:[%s0 + $0x10] sm:$0xf]
    %v46 = vld [vmem:[%s2] sm:$0xff]
    %v47 = vld [vmem:[%s2 + $0x8] sm:$0xff]
    %v48 = vld [vmem:[%s2 + $0x10] sm:$0xff]
    %v49 = vld [vmem:[%s2 + $0x18] sm:$0xff]
    %v50 = vld [vmem:[%s2 + $0x20] sm:$0xff]
    %v51 = vld [vmem:[%s2 + $0x28] sm:$0xff]
    %v52 = vld [vmem:[%s2 + $0x30] sm:$0xff]
    %v53 = vld [vmem:[%s2 + $0x38] sm:$0xff]
    %55 = vset.pattern.permute.xlu0 0
    %56 = vperm.xlu0 %55, %v46
    %v57 = vpop.permute.xlu0 %56
    %60 = vset.pattern.permute.xlu0 0
    %61 = vperm.xlu0 %60, %v47
    %v62 = vpop.permute.xlu0 %61
    %65 = vset.pattern.permute.xlu0 0
    %66 = vperm.xlu0 %65, %v48
    %v67 = vpop.permute.xlu0 %66
    %70 = vset.pattern.permute.xlu0 0
    %71 = vperm.xlu0 %70, %v49
    %v72 = vpop.permute.xlu0 %71
    %75 = vset.pattern.permute.xlu0 0
    %76 = vperm.xlu0 %75, %v50
    %v77 = vpop.permute.xlu0 %76
    %80 = vset.pattern.permute.xlu0 0
    %81 = vperm.xlu0 %80, %v51
    %v82 = vpop.permute.xlu0 %81
    %85 = vset.pattern.permute.xlu0 0
    %86 = vperm.xlu0 %85, %v52
    %v87 = vpop.permute.xlu0 %86
    %90 = vset.pattern.permute.xlu0 0
    %91 = vperm.xlu0 %90, %v53
    %v92 = vpop.permute.xlu0 %91
    %vm94 = vcmask 162816
    %v96 = vsel %vm94, %v35, 0
    %v99 = vsel %vm94, %v36, 0
    %v102 = vsel %vm94, %v37, 0
    %v105 = vsel %vm94, %v38, 0
    %v108 = vsel %vm94, %v39, 0
    %v111 = vsel %vm94, %v40, 0
    %v114 = vsel %vm94, %v41, 0
    %v117 = vsel %vm94, %v42, 0
    %vm119 = vcmask 1043456
    %v121 = vsel %vm119, %v45, 0
    %123 = vmatpush.msra.mxu0 0.0
    %124 = vmatpush.msra.mxu0 0.0
    %125 = vmatpush.msra.mxu0 0.0
    %126 = vmatpush.msra.mxu0 0.0
    %127 = vmatpush.msra.mxu0 0.0
    %128 = vmatpush.msra.mxu0 0.0
    %129 = vmatpush.msra.mxu0 0.0
    %130 = vmatpush.msra.mxu0 0.0
    %131 = vmatpush.msra.mxu0 0.0
    %132 = vmatpush.msra.mxu0 0.0
    %133 = vmatpush.msra.mxu0 0.0
    %134 = vmatpush.msra.mxu0 0.0
    %135 = vmatpush.msra.mxu0 0.0
    %136 = vmatpush.msra.mxu0 %v121
    %137 = vmatpush.msra.mxu0 %v44
    %138 = vmatpush.msra.mxu0 %v43
    %139 = vmatmul.f32.gmra.mxu0 %v96
    %v140 = vpop.f32.mrf.mxu0
    %v141 = vadd.f32 %v57, %v140
    %142 = vmatmul.f32.gmra.mxu0 %v99
    %v143 = vpop.f32.mrf.mxu0
    %v144 = vadd.f32 %v62, %v143
    %145 = vmatmul.f32.gmra.mxu0 %v102
    %v146 = vpop.f32.mrf.mxu0
    %v147 = vadd.f32 %v67, %v146
    %148 = vmatmul.f32.gmra.mxu0 %v105
    %v149 = vpop.f32.mrf.mxu0
    %v150 = vadd.f32 %v72, %v149
    %151 = vmatmul.f32.gmra.mxu0 %v108
    %v152 = vpop.f32.mrf.mxu0
    %v153 = vadd.f32 %v77, %v152
    %154 = vmatmul.f32.gmra.mxu0 %v111
    %v155 = vpop.f32.mrf.mxu0
    %v156 = vadd.f32 %v82, %v155
    %157 = vmatmul.f32.gmra.mxu0 %v114
    %v158 = vpop.f32.mrf.mxu0
    %v159 = vadd.f32 %v87, %v158
    %160 = vmatmul.f32.gmra.mxu0 %v117
    %v161 = vpop.f32.mrf.mxu0
    %v162 = vadd.f32 %v92, %v161
    %163 = vdwg.mxu0
    %v164 = vmax.f32 %v141, 0.0
    %v165 = vmax.f32 %v144, 0.0
    %v166 = vmax.f32 %v147, 0.0
    %v167 = vmax.f32 %v150, 0.0
    %v168 = vmax.f32 %v153, 0.0
    %v169 = vmax.f32 %v156, 0.0
    %v170 = vmax.f32 %v159, 0.0
    %v171 = vmax.f32 %v162, 0.0
    %v172 = vld [vmem:[%s3] sm:$0xff]
    %v173 = vld [vmem:[%s3 + $0x8] sm:$0xff]
    %v174 = vld [vmem:[%s3 + $0x10] sm:$0xff]
    %v175 = vld [vmem:[%s3 + $0x18] sm:$0xff]
    %v176 = vld [vmem:[%s3 + $0x20] sm:$0xff]
    %v177 = vld [vmem:[%s3 + $0x28] sm:$0xff]
    %v178 = vld [vmem:[%s3 + $0x30] sm:$0xff]
    %v179 = vld [vmem:[%s3 + $0x38] sm:$0xff]
    %v180 = vld [vmem:[%s4] sm:$0xff]
    %v181 = vld [vmem:[%s4 + $0x8] sm:$0xff]
    %v182 = vld [vmem:[%s4 + $0x10] sm:$0xff]
    %v183 = vld [vmem:[%s4 + $0x18] sm:$0xff]
    %v184 = vld [vmem:[%s4 + $0x20] sm:$0xff]
    %v185 = vld [vmem:[%s4 + $0x28] sm:$0xff]
    %v186 = vld [vmem:[%s4 + $0x30] sm:$0xff]
    %v187 = vld [vmem:[%s4 + $0x38] sm:$0xff]
    %189 = vset.pattern.permute.xlu0 0
    %190 = vperm.xlu0 %189, %v180
    %v191 = vpop.permute.xlu0 %190
    %194 = vset.pattern.permute.xlu0 0
    %195 = vperm.xlu0 %194, %v181
    %v196 = vpop.permute.xlu0 %195
    %199 = vset.pattern.permute.xlu0 0
    %200 = vperm.xlu0 %199, %v182
    %v201 = vpop.permute.xlu0 %200
    %204 = vset.pattern.permute.xlu0 0
    %205 = vperm.xlu0 %204, %v183
    %v206 = vpop.permute.xlu0 %205
    %209 = vset.pattern.permute.xlu0 0
    %210 = vperm.xlu0 %209, %v184
    %v211 = vpop.permute.xlu0 %210
    %214 = vset.pattern.permute.xlu0 0
    %215 = vperm.xlu0 %214, %v185
    %v216 = vpop.permute.xlu0 %215
    %219 = vset.pattern.permute.xlu0 0
    %220 = vperm.xlu0 %219, %v186
    %v221 = vpop.permute.xlu0 %220
    %224 = vset.pattern.permute.xlu0 0
    %225 = vperm.xlu0 %224, %v187
    %v226 = vpop.permute.xlu0 %225
    %vm228 = vcmask 523264
    %v230 = vsel %vm228, %v172, 0
    %v233 = vsel %vm228, %v173, 0
    %v236 = vsel %vm228, %v174, 0
    %v239 = vsel %vm228, %v175, 0
    %v242 = vsel %vm228, %v176, 0
    %v245 = vsel %vm228, %v177, 0
    %v248 = vsel %vm228, %v178, 0
    %v251 = vsel %vm228, %v179, 0
    %253 = vmatpush.msra.mxu0 0.0
    %254 = vmatpush.msra.mxu0 0.0
    %255 = vmatpush.msra.mxu0 0.0
    %256 = vmatpush.msra.mxu0 0.0
    %257 = vmatpush.msra.mxu0 0.0
    %258 = vmatpush.msra.mxu0 0.0
    %259 = vmatpush.msra.mxu0 0.0
    %260 = vmatpush.msra.mxu0 0.0
    %261 = vmatpush.msra.mxu0 %v171
    %262 = vmatpush.msra.mxu0 %v170
    %263 = vmatpush.msra.mxu0 %v169
    %264 = vmatpush.msra.mxu0 %v168
    %265 = vmatpush.msra.mxu0 %v167
    %266 = vmatpush.msra.mxu0 %v166
    %267 = vmatpush.msra.mxu0 %v165
    %268 = vmatpush.msra.mxu0 %v164
    %269 = vmatmul.f32.gmra.mxu0 %v230
    %v270 = vpop.f32.mrf.mxu0
    %v271 = vadd.f32 %v191, %v270
    %272 = vmatmul.f32.gmra.mxu0 %v233
    %v273 = vpop.f32.mrf.mxu0
    %v274 = vadd.f32 %v196, %v273
    %275 = vmatmul.f32.gmra.mxu0 %v236
    %v276 = vpop.f32.mrf.mxu0
    %v277 = vadd.f32 %v201, %v276
    %278 = vmatmul.f32.gmra.mxu0 %v239
    %v279 = vpop.f32.mrf.mxu0
    %v280 = vadd.f32 %v206, %v279
    %281 = vmatmul.f32.gmra.mxu0 %v242
    %v282 = vpop.f32.mrf.mxu0
    %v283 = vadd.f32 %v211, %v282
    %284 = vmatmul.f32.gmra.mxu0 %v245
    %v285 = vpop.f32.mrf.mxu0
    %v286 = vadd.f32 %v216, %v285
    %287 = vmatmul.f32.gmra.mxu0 %v248
    %v288 = vpop.f32.mrf.mxu0
    %v289 = vadd.f32 %v221, %v288
    %290 = vmatmul.f32.gmra.mxu0 %v251
    %v291 = vpop.f32.mrf.mxu0
    %v292 = vadd.f32 %v226, %v291
    %293 = vdwg.mxu0
    %v294 = vmax.f32 %v271, 0.0
    %v295 = vmax.f32 %v274, 0.0
    %v296 = vmax.f32 %v277, 0.0
    %v297 = vmax.f32 %v280, 0.0
    %v298 = vmax.f32 %v283, 0.0
    %v299 = vmax.f32 %v286, 0.0
    %v300 = vmax.f32 %v289, 0.0
    %v301 = vmax.f32 %v292, 0.0
    %v302 = vld [vmem:[%s5] sm:$0xff]
    %v303 = vld [vmem:[%s5 + $0x8] sm:$0xff]
    %v304 = vld [vmem:[%s5 + $0x10] sm:$0xff]
    %v305 = vld [vmem:[%s5 + $0x18] sm:$0xff]
    %v306 = vld [vmem:[%s5 + $0x20] sm:$0xff]
    %v307 = vld [vmem:[%s5 + $0x28] sm:$0xff]
    %v308 = vld [vmem:[%s5 + $0x30] sm:$0xff]
    %v309 = vld [vmem:[%s5 + $0x38] sm:$0xff]
    %v310 = vld [vmem:[%s6] sm:$0xff]
    %v311 = vld [vmem:[%s6 + $0x8] sm:$0xff]
    %v312 = vld [vmem:[%s6 + $0x10] sm:$0xff]
    %v313 = vld [vmem:[%s6 + $0x18] sm:$0xff]
    %v314 = vld [vmem:[%s6 + $0x20] sm:$0xff]
    %v315 = vld [vmem:[%s6 + $0x28] sm:$0xff]
    %v316 = vld [vmem:[%s6 + $0x30] sm:$0xff]
    %v317 = vld [vmem:[%s6 + $0x38] sm:$0xff]
    %319 = vset.pattern.permute.xlu0 0
    %320 = vperm.xlu0 %319, %v310
    %v321 = vpop.permute.xlu0 %320
    %324 = vset.pattern.permute.xlu0 0
    %325 = vperm.xlu0 %324, %v311
    %v326 = vpop.permute.xlu0 %325
    %329 = vset.pattern.permute.xlu0 0
    %330 = vperm.xlu0 %329, %v312
    %v331 = vpop.permute.xlu0 %330
    %334 = vset.pattern.permute.xlu0 0
    %335 = vperm.xlu0 %334, %v313
    %v336 = vpop.permute.xlu0 %335
    %339 = vset.pattern.permute.xlu0 0
    %340 = vperm.xlu0 %339, %v314
    %v341 = vpop.permute.xlu0 %340
    %344 = vset.pattern.permute.xlu0 0
    %345 = vperm.xlu0 %344, %v315
    %v346 = vpop.permute.xlu0 %345
    %349 = vset.pattern.permute.xlu0 0
    %350 = vperm.xlu0 %349, %v316
    %v351 = vpop.permute.xlu0 %350
    %354 = vset.pattern.permute.xlu0 0
    %355 = vperm.xlu0 %354, %v317
    %v356 = vpop.permute.xlu0 %355
    %v359 = vsel %vm228, %v302, 0
    %v362 = vsel %vm228, %v303, 0
    %v365 = vsel %vm228, %v304, 0
    %v368 = vsel %vm228, %v305, 0
    %v371 = vsel %vm228, %v306, 0
    %v374 = vsel %vm228, %v307, 0
    %v377 = vsel %vm228, %v308, 0
    %v380 = vsel %vm228, %v309, 0
    %382 = vmatpush.msra.mxu0 0.0
    %383 = vmatpush.msra.mxu0 0.0
    %384 = vmatpush.msra.mxu0 0.0
    %385 = vmatpush.msra.mxu0 0.0
    %386 = vmatpush.msra.mxu0 0.0
    %387 = vmatpush.msra.mxu0 0.0
    %388 = vmatpush.msra.mxu0 0.0
    %389 = vmatpush.msra.mxu0 0.0
    %390 = vmatpush.msra.mxu0 %v301
    %391 = vmatpush.msra.mxu0 %v300
    %392 = vmatpush.msra.mxu0 %v299
    %393 = vmatpush.msra.mxu0 %v298
    %394 = vmatpush.msra.mxu0 %v297
    %395 = vmatpush.msra.mxu0 %v296
    %396 = vmatpush.msra.mxu0 %v295
    %397 = vmatpush.msra.mxu0 %v294
    %398 = vmatmul.f32.gmra.mxu0 %v359
    %v399 = vpop.f32.mrf.mxu0
    %v400 = vadd.f32 %v321, %v399
    %401 = vmatmul.f32.gmra.mxu0 %v362
    %v402 = vpop.f32.mrf.mxu0
    %v403 = vadd.f32 %v326, %v402
    %404 = vmatmul.f32.gmra.mxu0 %v365
    %v405 = vpop.f32.mrf.mxu0
    %v406 = vadd.f32 %v331, %v405
    %407 = vmatmul.f32.gmra.mxu0 %v368
    %v408 = vpop.f32.mrf.mxu0
    %v409 = vadd.f32 %v336, %v408
    %410 = vmatmul.f32.gmra.mxu0 %v371
    %v411 = vpop.f32.mrf.mxu0
    %v412 = vadd.f32 %v341, %v411
    %413 = vmatmul.f32.gmra.mxu0 %v374
    %v414 = vpop.f32.mrf.mxu0
    %v415 = vadd.f32 %v346, %v414
    %416 = vmatmul.f32.gmra.mxu0 %v377
    %v417 = vpop.f32.mrf.mxu0
    %v418 = vadd.f32 %v351, %v417
    %419 = vmatmul.f32.gmra.mxu0 %v380
    %v420 = vpop.f32.mrf.mxu0
    %v421 = vadd.f32 %v356, %v420
    %422 = vdwg.mxu0
    %v423 = vmax.f32 %v400, 0.0
    %v424 = vmax.f32 %v403, 0.0
    %v425 = vmax.f32 %v406, 0.0
    %v426 = vmax.f32 %v409, 0.0
    %v427 = vmax.f32 %v412, 0.0
    %v428 = vmax.f32 %v415, 0.0
    %v429 = vmax.f32 %v418, 0.0
    %v430 = vmax.f32 %v421, 0.0
    %v431 = vld [vmem:[%s7] sm:$0xff]
    %v432 = vld [vmem:[%s7 + $0x8] sm:$0xff]
    %v433 = vld [vmem:[%s7 + $0x10] sm:$0xff]
    %v434 = vld [vmem:[%s7 + $0x18] sm:$0xff]
    %v435 = vld [vmem:[%s7 + $0x20] sm:$0xff]
    %v436 = vld [vmem:[%s7 + $0x28] sm:$0xff]
    %v437 = vld [vmem:[%s7 + $0x30] sm:$0xff]
    %v438 = vld [vmem:[%s7 + $0x38] sm:$0xff]
    %440 = vset.pattern.permute.xlu0 0
    %441 = vperm.xlu0 %440, %v431
    %v442 = vpop.permute.xlu0 %441
    %445 = vset.pattern.permute.xlu0 0
    %446 = vperm.xlu0 %445, %v432
    %v447 = vpop.permute.xlu0 %446
    %450 = vset.pattern.permute.xlu0 0
    %451 = vperm.xlu0 %450, %v433
    %v452 = vpop.permute.xlu0 %451
    %455 = vset.pattern.permute.xlu0 0
    %456 = vperm.xlu0 %455, %v434
    %v457 = vpop.permute.xlu0 %456
    %460 = vset.pattern.permute.xlu0 0
    %461 = vperm.xlu0 %460, %v435
    %v462 = vpop.permute.xlu0 %461
    %465 = vset.pattern.permute.xlu0 0
    %466 = vperm.xlu0 %465, %v436
    %v467 = vpop.permute.xlu0 %466
    %470 = vset.pattern.permute.xlu0 0
    %471 = vperm.xlu0 %470, %v437
    %v472 = vpop.permute.xlu0 %471
    %475 = vset.pattern.permute.xlu0 0
    %476 = vperm.xlu0 %475, %v438
    %v477 = vpop.permute.xlu0 %476
    %v479 = vmul.f32 %v423, %v442
    %v480 = vmul.f32 %v424, %v447
    %v481 = vmul.f32 %v425, %v452
    %v482 = vmul.f32 %v426, %v457
    %v483 = vmul.f32 %v427, %v462
    %v484 = vmul.f32 %v428, %v467
    %v485 = vmul.f32 %v429, %v472
    %v486 = vmul.f32 %v430, %v477
    %vm487 = vcmask 64512
    %v488 = vsel %vm487, %v479, 0.0
    %v489 = vsel %vm487, %v480, 0.0
    %v490 = vadd.f32 %v488, %v489
    %v491 = vsel %vm487, %v481, 0.0
    %v492 = vadd.f32 %v490, %v491
    %v493 = vsel %vm487, %v482, 0.0
    %v494 = vadd.f32 %v492, %v493
    %v495 = vsel %vm487, %v483, 0.0
    %v496 = vadd.f32 %v494, %v495
    %v497 = vsel %vm487, %v484, 0.0
    %v498 = vadd.f32 %v496, %v497
    %v499 = vsel %vm487, %v485, 0.0
    %v500 = vadd.f32 %v498, %v499
    %v501 = vsel %vm487, %v486, 0.0
    %v502 = vadd.f32 %v500, %v501
    %v503 = vrot.slane %v502, 4
    %v504 = vadd.f32 %v502, %v503
    %v505 = vrot.slane %v504, 2
    %v506 = vadd.f32 %v504, %v505
    %v507 = vrot.slane %v506, 1
    %v508 = vadd.f32 %v506, %v507
    %v509 = vld [vmem:[#allocation2] sm:$0x1]
    %511 = vset.pattern.permute.xlu0 0
    %512 = vperm.xlu0 %511, %v509
    %v513 = vpop.permute.xlu0 %512
    %v515 = vperm.slane %v513, 0
    %v516 = vadd.f32 %v508, %v515
    %v517 = vxor.u32 %v516, 2147483648
    %v518 = vmul.f32 %v517, 1.442695
    %v519 = vpow.pop %v518
    %v520 = vadd.f32 %v519, 1.0
    %v521 = vrcp.pop %v520
    %v522 = vmul.f32 %v520, %v521
    %v523 = vsub.f32 1.0, %v522
    %v524 = vmul.f32 %v521, %v523
    %v525 = vadd.f32 %v521, %v524
    %vm526 = vweird.f32 %v520
    %vm527 = vweird.f32 %v521
    %vm528 = vmor %vm526, %vm527
    %v529 = vsel %vm528, %v521, %v525
    %v530 = vand.u32 2147483647, %v520
    %vm531 = vcmp.eq.f32.partialorder %v530, 8.507059e+37
    %v532 = vand.u32 %v520, 2147483648
    %v533 = vor.u32 1.1754944e-38, %v532
    %v534 = vsel %vm531, %v533, %v529
    %v535 = vmul.f32 1.0, %v534
    %v536 = vmul.f32 %v535, -20.0
    %vm537 = vcmask 57344
    %538 = vst.msk [vmem:[#allocation3] sm:$0x1] %vm537, %v536
    // Predicated region
    $region38: #{tpu_custom_call.1} parent=1 // pred_check
      _
    $region39: #{tpu_custom_call.1} parent=1 // pred_check_branch
      %540 = sbr.rel (0) target = $region41
    $region40: #{tpu_custom_call.1} parent=1 // pred_region
      %542 = vsyncadd [#allocation4], 0
      %s544 = sshll.u32 [#allocation3], 4
      %s545 = int_to_ptr.vmem [resolvable:$true] %s544
      %s546 = sshll.u32 %s9, 4
      %s547 = int_to_ptr.hbm [resolvable:$true] %s546
      %549 = dma.vmem_to_hbm [thread:$0]  %s545, 16, %s547, [#allocation4]
    $region41: #{tpu_custom_call.1} parent=1 // pred_fallthru
      _
    // Predicated region
    $region42: #{tpu_custom_call.1} parent=1 // pred_check
      _
    $region43: #{tpu_custom_call.1} parent=1 // pred_check_branch
      %551 = sbr.rel (0) target = $region45
    $region44: #{tpu_custom_call.1} parent=1 // pred_region
      %553 = dma.done [#allocation4], 16
    $region45: #{tpu_custom_call.1} parent=1 // pred_fallthru
      _
    %554 = vsyncpa [#allocation4], 1

</llo_original>
